<compile_context>
chip_gen: v7x
topology: tpu7x:2x2x1
jax: 0.10.0
libtpu: 0.0.40
codegen_flags: <defaults>
</compile_context>

<pallas_src>
import functools
import math

import jax
import jax.numpy as jnp
from jax import lax
from jax.experimental import pallas as pl
from jax.experimental.pallas import tpu as pltpu


def _round_up(x, m):
    return ((x + m - 1) // m) * m


# ---------------------------------------------------------------------------
# Kernels
# ---------------------------------------------------------------------------

def _meta_linear_fast_kernel(x_ref, w_ref, b_ref, o_ref):
    """Single-K-step path: tk == K, so one MXU contraction per output tile."""
    acc = lax.dot_general(
        x_ref[...],
        w_ref[...],
        dimension_numbers=(((1,), (1,)), ((), ())),  # contract last dims (x @ W.T)
        preferred_element_type=jnp.float32,
    )
    o_ref[...] = (acc + b_ref[...].astype(jnp.float32)).astype(o_ref.dtype)


def _meta_linear_acc_kernel(x_ref, w_ref, b_ref, o_ref, acc_ref, *,
                            k_total, tk, mask_k):
    """Multi-K-step path with a resident f32 accumulator scratch."""
    k = pl.program_id(2)

    @pl.when(k == 0)
    def _init():
        # Fold the bias into the accumulator init: (1, tn) -> (tm, tn).
        acc_ref[...] = jnp.broadcast_to(
            b_ref[...].astype(jnp.float32), acc_ref.shape
        )

    x = x_ref[...]
    w = w_ref[...]
    if mask_k:
        # K does not divide tk: zero the padded tail columns of BOTH operands so
        # unspecified edge-block data (possibly NaN/Inf bits) never contributes.
        lane = lax.broadcasted_iota(jnp.int32, (1, tk), 1)
        valid = (k * tk + lane) < k_total          # (1, tk) bool
        x = jnp.where(valid, x, jnp.zeros_like(x))
        w = jnp.where(valid, w, jnp.zeros_like(w))

    acc_ref[...] += lax.dot_general(
        x,
        w,
        dimension_numbers=(((1,), (1,)), ((), ())),
        preferred_element_type=jnp.float32,
    )

    @pl.when(k == pl.num_programs(2) - 1)
    def _store():
        o_ref[...] = acc_ref[...].astype(o_ref.dtype)


# ---------------------------------------------------------------------------
# Wrapper
# ---------------------------------------------------------------------------

def meta_linear(x, weight, bias, *, compute_dtype=None, tm=None, tn=None, tk=None):
    """F.linear(x, weight, bias):  x (B, K), weight (N, K), bias (N,) -> (B, N).

    compute_dtype: optional dtype (e.g. jnp.bfloat16) for the streamed operands.
    The accumulation is always f32 and the output keeps x's original dtype.
    """
    B, K = x.shape
    N, K2 = weight.shape
    assert K == K2, "in_features mismatch"
    assert bias.shape == (N,), "bias shape mismatch"

    out_dtype = x.dtype
    if compute_dtype is not None:
        x = x.astype(compute_dtype)
        weight = weight.astype(compute_dtype)

    # --- tile selection (no padded copies of x / weight are ever made) ---
    TM_MAX, TN_MAX, TK_MAX = 512, 512, 1024
    auto_tn = tn is None
    if tm is None:
        tm = B if B <= TM_MAX else TM_MAX
    if tn is None:
        tn = N if N <= TN_MAX else TN_MAX
    if tk is None:
        if K <= TK_MAX:
            tk = K                      # single K step -> fast path
        elif K % 1024 == 0:
            tk = 1024
        elif K % 512 == 0:
            tk = 512
        else:
            tk = 1024                   # ragged K tail, masked in-kernel

    grid_m = pl.cdiv(B, tm)
    grid_n = pl.cdiv(N, tn)
    # Megacore (v7x has 2 TensorCores): make sure there are >= 2 output tiles
    # along the parallel axes when the problem allows it.
    if auto_tn and grid_m * grid_n < 2 and N > 128:
        tn = _round_up((N + 1) // 2, 128)
        grid_n = pl.cdiv(N, tn)

    grid_k = pl.cdiv(K, tk)
    mask_k = (K % tk) != 0

    bias2d = bias.reshape(1, N)

    in_size = jnp.dtype(x.dtype).itemsize
    out_size = jnp.dtype(out_dtype).itemsize
    b_size = jnp.dtype(bias.dtype).itemsize
    # Real streamed bytes: x is re-read once per N tile, W once per M tile.
    cost = pl.CostEstimate(
        flops=2 * B * N * K,
        bytes_accessed=(grid_n * B * K + grid_m * N * K) * in_size
        + B * N * out_size
        + grid_m * N * b_size,
        transcendentals=0,
    )

    # Double-buffered streams + output + (optional) f32 accumulator scratch.
    footprint = (
        2 * (tm * tk + tn * tk) * in_size
        + 2 * tn * b_size
        + 2 * tm * tn * out_size
        + (tm * tn * 4 if grid_k > 1 else 0)
    )
    # Cap at 48 MiB so the same config stays legal on v7x (64 MiB physical VMEM).
    vmem_limit = min(48 * 1024 * 1024, max(32 * 1024 * 1024, 2 * footprint))

    if grid_k == 1:
        out = pl.pallas_call(
            _meta_linear_fast_kernel,
            out_shape=jax.ShapeDtypeStruct((B, N), out_dtype),
            grid_spec=pltpu.PrefetchScalarGridSpec(
                num_scalar_prefetch=0,
                grid=(grid_m, grid_n),
                in_specs=[
                    pl.BlockSpec((tm, tk), lambda i, j: (i, 0)),   # x tile
                    pl.BlockSpec((tn, tk), lambda i, j: (j, 0)),   # W tile (native N,K)
                    pl.BlockSpec((1, tn), lambda i, j: (0, j)),    # bias tile
                ],
                out_specs=pl.BlockSpec((tm, tn), lambda i, j: (i, j)),
            ),
            compiler_params=pltpu.CompilerParams(
                dimension_semantics=("parallel", "parallel"),
                vmem_limit_bytes=vmem_limit,
            ),
            cost_estimate=cost,
        )(x, weight, bias2d)
    else:
        kernel = functools.partial(
            _meta_linear_acc_kernel, k_total=K, tk=tk, mask_k=mask_k
        )
        out = pl.pallas_call(
            kernel,
            out_shape=jax.ShapeDtypeStruct((B, N), out_dtype),
            grid_spec=pltpu.PrefetchScalarGridSpec(
                num_scalar_prefetch=0,
                grid=(grid_m, grid_n, grid_k),
                in_specs=[
                    pl.BlockSpec((tm, tk), lambda i, j, k: (i, k)),   # x tile
                    pl.BlockSpec((tn, tk), lambda i, j, k: (j, k)),   # W tile
                    pl.BlockSpec((1, tn), lambda i, j, k: (0, j)),    # bias tile
                ],
                out_specs=pl.BlockSpec((tm, tn), lambda i, j, k: (i, j)),
                scratch_shapes=[pltpu.VMEM((tm, tn), jnp.float32)],
            ),
            compiler_params=pltpu.CompilerParams(
                dimension_semantics=("parallel", "parallel", "arbitrary"),
                vmem_limit_bytes=vmem_limit,
            ),
            cost_estimate=cost,
        )(x, weight, bias2d)

    return out


def init_meta_linear_params(key, in_features, out_features):
    """Deterministic nn.Linear-style init: U(-1/sqrt(in), 1/sqrt(in))."""
    kw, kb = jax.random.split(key)
    bound = 1.0 / math.sqrt(in_features)
    weight = jax.random.uniform(
        kw, (out_features, in_features), jnp.float32, -bound, bound
    )
    bias = jax.random.uniform(kb, (out_features,), jnp.float32, -bound, bound)
    return weight, bias


if __name__ == "__main__":
    key = jax.random.PRNGKey(0)
    k_x, k_p, k_x2, k_p2 = jax.random.split(key, 4)

    # --- small case: single-K-step fast path (the module's typical head sizes) ---
    B, in_features, out_features = 8, 32, 64
    x = jax.random.normal(k_x, (B, in_features), jnp.float32)
    weight, bias = init_meta_linear_params(k_p, in_features, out_features)
    ref = jnp.dot(x, weight.T, precision=jax.lax.Precision.HIGHEST) + bias

    out = jax.block_until_ready(meta_linear(x, weight, bias))
    assert out.shape == (B, out_features)
    assert jnp.allclose(out, ref, atol=1e-4, rtol=1e-4), "f32 fast path mismatch"

    # bf16 streamed operands (native MXU path), f32 accumulate / output.
    out_bf16 = jax.block_until_ready(
        meta_linear(x, weight, bias, compute_dtype=jnp.bfloat16)
    )
    assert out_bf16.dtype == jnp.float32
    assert jnp.allclose(out_bf16, ref, atol=5e-2, rtol=5e-2), "bf16 path mismatch"

    # --- larger-K case: tiled accumulator path with a ragged K tail (2304 % 1024 != 0) ---
    B2, in_f2, out_f2 = 16, 2304, 64
    x2 = jax.random.normal(k_x2, (B2, in_f2), jnp.float32)
    w2, b2 = init_meta_linear_params(k_p2, in_f2, out_f2)
    ref2 = jnp.dot(x2, w2.T, precision=jax.lax.Precision.HIGHEST) + b2

    out2 = jax.block_until_ready(meta_linear(x2, w2, b2))
    assert out2.shape == (B2, out_f2)
    assert jnp.allclose(out2, ref2, atol=2e-3, rtol=2e-3), "tiled K path mismatch"

    print("KERNEL_OK")
</pallas_src>

<mosaic_0001>
module attributes {stable_mosaic.version = 11 : i64} {
  func.func @_meta_linear_fast_kernel(%arg0: i32, %arg1: i32, %arg2: memref<8x32xf32, #tpu.memory_space<vmem>>, %arg3: memref<64x32xf32, #tpu.memory_space<vmem>>, %arg4: memref<1x64xf32, #tpu.memory_space<vmem>>, %arg5: memref<8x64xf32, #tpu.memory_space<vmem>>) attributes {dimension_semantics = [#tpu.dimension_semantics<parallel>, #tpu.dimension_semantics<parallel>], iteration_bounds = array<i64: 1, 1>, scalar_prefetch = 0 : i64, scratch_operands = 0 : i64, tpu.core_type = #tpu.core_type<tc>, window_params = [{transform_indices = @transform_0, window_bounds = array<i64: 8, 32>}, {transform_indices = @transform_1, window_bounds = array<i64: 64, 32>}, {transform_indices = @transform_2, window_bounds = array<i64: 1, 64>}, {transform_indices = @transform_3, window_bounds = array<i64: 8, 64>}]} {
    %c0 = arith.constant 0 : index
    %c0_0 = arith.constant 0 : index
    %0 = vector.load %arg2[%c0, %c0_0] : memref<8x32xf32, #tpu.memory_space<vmem>>, vector<8x32xf32>
    %c0_1 = arith.constant 0 : index
    %c0_2 = arith.constant 0 : index
    %1 = vector.load %arg3[%c0_1, %c0_2] : memref<64x32xf32, #tpu.memory_space<vmem>>, vector<64x32xf32>
    %cst = arith.constant dense<0.000000e+00> : vector<8x64xf32>
    %2 = tpu.matmul %0, %1, %cst {dimension_numbers = #tpu.dot_dimension_numbers<[1], [1], [0], [0], [0, 0, 1, 0], [], []>} : vector<8x32xf32>, vector<64x32xf32>, vector<8x64xf32> -> vector<8x64xf32>
    %c0_3 = arith.constant 0 : index
    %c0_4 = arith.constant 0 : index
    %3 = vector.load %arg4[%c0_3, %c0_4] : memref<1x64xf32, #tpu.memory_space<vmem>>, vector<1x64xf32>
    %4 = vector.broadcast %3 : vector<1x64xf32> to vector<8x64xf32>
    %5 = arith.addf %2, %4 : vector<8x64xf32>
    %c0_5 = arith.constant 0 : index
    %c0_6 = arith.constant 0 : index
    %6 = vector.load %arg5[%c0_5, %c0_6] : memref<8x64xf32, #tpu.memory_space<vmem>>, vector<8x64xf32>
    tpu.vector_store %arg5[%c0_5, %c0_6], %5 {strides = array<i32>} : memref<8x64xf32, #tpu.memory_space<vmem>>, vector<8x64xf32>,
    return
  }
  func.func @transform_0(%arg0: i32, %arg1: i32) -> (i32, i32) {
    %c0_i32 = arith.constant 0 : i32
    %c0_i32_0 = arith.constant 0 : i32
    return %arg0, %c0_i32 : i32, i32
  }
  func.func @transform_1(%arg0: i32, %arg1: i32) -> (i32, i32) {
    %c0_i32 = arith.constant 0 : i32
    %c0_i32_0 = arith.constant 0 : i32
    return %arg1, %c0_i32 : i32, i32
  }
  func.func @transform_2(%arg0: i32, %arg1: i32) -> (i32, i32) {
    %c0_i32 = arith.constant 0 : i32
    %c0_i32_0 = arith.constant 0 : i32
    return %c0_i32, %arg1 : i32, i32
  }
  func.func @transform_3(%arg0: i32, %arg1: i32) -> (i32, i32) {
    %c0_i32 = arith.constant 0 : i32
    return %arg0, %arg1 : i32, i32
  }
}

</mosaic_0001>

<llo_original>
// kernel: tpu_custom_call.1
$region0: #{tpu_custom_call.1}
  #allocation0 [shape = 'u32[]', space=smem, size = 0x4, offset = 0x4, fixed_abs, tag = 'smem constant byte address 0x4 - core index']
  #allocation1 [shape = 'u32[144,128]{1,0:T(1,128)}', space=vmem, size = 0x12000, scoped, tag = 'internal scratch']
  %s0 = inlined_call_operand.vmem [shape: f32[8,32], index: 0, kind: input, shape index: {}]
  %s1 = inlined_call_operand.vmem [shape: f32[64,32], index: 1, kind: input, shape index: {}]
  %s2 = inlined_call_operand.vmem [shape: f32[1,64], index: 2, kind: input, shape index: {}]
  %s3 = inlined_call_operand.hbm [shape: f32[8,64], index: 3, kind: output, shape index: {}]
  %s4 = sld [smem:[#allocation0]]
  $region22: #{tpu_custom_call.1} parent=0
    _
  %s6 = ssub.s32 1, %s4
  %s7 = scalar_select 0, %s6, %s4
  $region1: #{tpu_custom_call.1} parent=0
    #allocation2 [shape = 'u8[4096]{0}', space=vmem, size = 0x1000, scoped, tag = 'output window, operand 0, single buffered']
    #allocation3 [shape = 's32[1]{0}', space=sflag, size = 0x4, scoped, tag = 'scoped memory for tpu_custom_call.1']
    %8 = vsyncpa [#allocation3], 0
    // Predicated region
    $region2: #{tpu_custom_call.1} parent=1 // pred_check
      _
    $region3: #{tpu_custom_call.1} parent=1 // pred_check_branch
      %10 = sbr.rel (0) target = $region5
    $region4: #{tpu_custom_call.1} parent=1 // pred_region
      _
    $region5: #{tpu_custom_call.1} parent=1 // pred_fallthru
      _
    // Predicated region
    $region6: #{tpu_custom_call.1} parent=1 // pred_check
      _
    $region7: #{tpu_custom_call.1} parent=1 // pred_check_branch
      %12 = sbr.rel (0) target = $region9
    $region8: #{tpu_custom_call.1} parent=1 // pred_region
      _
    $region9: #{tpu_custom_call.1} parent=1 // pred_fallthru
      _
    // Predicated region
    $region10: #{tpu_custom_call.1} parent=1 // pred_check
      _
    $region11: #{tpu_custom_call.1} parent=1 // pred_check_branch
      %14 = sbr.rel (0) target = $region13
    $region12: #{tpu_custom_call.1} parent=1 // pred_region
      _
    $region13: #{tpu_custom_call.1} parent=1 // pred_fallthru
      _
    %v15 = vld [vmem:[%s0] sm:$0xff]
    %v16 = vld [vmem:[%s1] sm:$0xff]
    %v17 = vld [vmem:[%s1 + $0x8] sm:$0xff]
    %v18 = vld [vmem:[%s1 + $0x10] sm:$0xff]
    %v19 = vld [vmem:[%s1 + $0x18] sm:$0xff]
    %v20 = vld [vmem:[%s1 + $0x20] sm:$0xff]
    %v21 = vld [vmem:[%s1 + $0x28] sm:$0xff]
    %v22 = vld [vmem:[%s1 + $0x30] sm:$0xff]
    %v23 = vld [vmem:[%s1 + $0x38] sm:$0xff]
    %v24 = vld [vmem:[%s2] sm:$0x1]
    %v26 = vlaneseq
    %v27 = vshrl.u32 %v26, 7
    %v28 = vsub.s32 0, %v27
    %v29 = vrot.slane %v24, %v28
    %vm31 = vcmask 261120
    %v33 = vsel %vm31, %v15, 0
    %v36 = vsel %vm31, %v16, 0
    %v39 = vsel %vm31, %v17, 0
    %v42 = vsel %vm31, %v18, 0
    %v45 = vsel %vm31, %v19, 0
    %v48 = vsel %vm31, %v20, 0
    %v51 = vsel %vm31, %v21, 0
    %v54 = vsel %vm31, %v22, 0
    %v57 = vsel %vm31, %v23, 0
    %59 = vmatprep.subr.mxu0 0.0
    %60 = vmatpush1.xpose.msra.mxu0 %v36
    %61 = vmatprep.subr.mxu0 0.0
    %62 = vmatpush1.xpose.msra.mxu0 %v39
    %63 = vmatprep.subr.mxu0 0.0
    %64 = vmatpush1.xpose.msra.mxu0 %v42
    %65 = vmatprep.subr.mxu0 0.0
    %66 = vmatpush1.xpose.msra.mxu0 %v45
    %67 = vmatprep.subr.mxu0 0.0
    %68 = vmatpush1.xpose.msra.mxu0 %v48
    %69 = vmatprep.subr.mxu0 0.0
    %70 = vmatpush1.xpose.msra.mxu0 %v51
    %71 = vmatprep.subr.mxu0 0.0
    %72 = vmatpush1.xpose.msra.mxu0 %v54
    %73 = vmatprep.subr.mxu0 0.0
    %74 = vmatpush1.xpose.msra.mxu0 %v57
    %75 = vmatprep.subr.mxu0 0.0
    %76 = vmatpush1.xpose.msra.mxu0 0.0
    %77 = vmatprep.subr.mxu0 0.0
    %78 = vmatpush1.xpose.msra.mxu0 0.0
    %79 = vmatprep.subr.mxu0 0.0
    %80 = vmatpush1.xpose.msra.mxu0 0.0
    %81 = vmatprep.subr.mxu0 0.0
    %82 = vmatpush1.xpose.msra.mxu0 0.0
    %83 = vmatprep.subr.mxu0 0.0
    %84 = vmatpush1.xpose.msra.mxu0 0.0
    %85 = vmatprep.subr.mxu0 0.0
    %86 = vmatpush1.xpose.msra.mxu0 0.0
    %87 = vmatprep.subr.mxu0 0.0
    %88 = vmatpush1.xpose.msra.mxu0 0.0
    %89 = vmatprep.subr.mxu0 0.0
    %90 = vmatpush1.xpose.msra.mxu0 0.0
    %91 = vmatprep.subr.mxu0 0.0
    %92 = vmatpush1.xpose.msra.mxu0 0.0
    %93 = vmatprep.subr.mxu0 0.0
    %94 = vmatpush1.xpose.msra.mxu0 0.0
    %95 = vmatprep.subr.mxu0 0.0
    %96 = vmatpush1.xpose.msra.mxu0 0.0
    %97 = vmatprep.subr.mxu0 0.0
    %98 = vmatpush1.xpose.msra.mxu0 0.0
    %99 = vmatprep.subr.mxu0 0.0
    %100 = vmatpush1.xpose.msra.mxu0 0.0
    %101 = vmatprep.subr.mxu0 0.0
    %102 = vmatpush1.xpose.msra.mxu0 0.0
    %103 = vmatprep.subr.mxu0 0.0
    %104 = vmatpush1.xpose.msra.mxu0 0.0
    %105 = vmatprep.subr.mxu0 0.0
    %106 = vmatpush1.xpose.msra.mxu0 0.0
    %107 = vmatprep.subr.mxu0 0.0
    %108 = vmatpush1.xpose.msra.mxu0 0.0
    %109 = vmatprep.subr.mxu0 0.0
    %110 = vmatpush1.xpose.msra.mxu0 0.0
    %111 = vmatprep.subr.mxu0 0.0
    %112 = vmatpush1.xpose.msra.mxu0 0.0
    %113 = vmatprep.subr.mxu0 0.0
    %114 = vmatpush1.xpose.msra.mxu0 0.0
    %115 = vmatprep.subr.mxu0 0.0
    %116 = vmatpush1.xpose.msra.mxu0 0.0
    %117 = vmatprep.subr.mxu0 0.0
    %118 = vmatpush1.xpose.msra.mxu0 0.0
    %119 = vmatprep.subr.mxu0 0.0
    %120 = vmatpush1.xpose.msra.mxu0 0.0
    %121 = vmatprep.subr.mxu0 0.0
    %122 = vmatpush1.xpose.msra.mxu0 0.0
    %123 = vmatprep.mubr.f32.mxu0 0.0
    %124 = vmatmul.mubr.f32.gmra.mrb[0].mxu0 %v33
    %v125 = vpop.f32.mrb[0].mxu0
    %v126 = vadd.f32 %v29, %v125
    %v127 = vpop.f32.mrb[0].mxu0
    %128 = vdwg.mxu0
    %vm129 = vcmask 523264
    %130 = vst.msk [vmem:[#allocation2] sm:$0xff] %vm129, %v126
    // Predicated region
    $region14: #{tpu_custom_call.1} parent=1 // pred_check
      _
    $region15: #{tpu_custom_call.1} parent=1 // pred_check_branch
      %132 = sbr.rel (0) target = $region17
    $region16: #{tpu_custom_call.1} parent=1 // pred_region
      %s134 = ssub.s32 128, 128
      %135 = vsyncadd [#allocation3], %s134
      %s137 = sshll.u32 [#allocation2], 4
      %s138 = int_to_ptr.vmem [resolvable:$true] %s137
      %140 = dma.vmem_to_hbm [thread:$0]  %s138, 128, %s3, [#allocation3]
    $region17: #{tpu_custom_call.1} parent=1 // pred_fallthru
      _
    // Predicated region
    $region18: #{tpu_custom_call.1} parent=1 // pred_check
      _
    $region19: #{tpu_custom_call.1} parent=1 // pred_check_branch
      %142 = sbr.rel (0) target = $region21
    $region20: #{tpu_custom_call.1} parent=1 // pred_region
      %143 = dma.done [#allocation3], 128
    $region21: #{tpu_custom_call.1} parent=1 // pred_fallthru
      _
    %144 = vsyncpa [#allocation3], 1

</llo_original>
